<compile_context>
chip_gen: v7x
topology: tpu7x:2x2x1
jax: 0.10.0
libtpu: 0.0.40
codegen_flags: <defaults>
</compile_context>

<pallas_src>
import functools

import jax
import jax.numpy as jnp
from jax.experimental import pallas as pl
from jax.experimental.pallas import tpu as pltpu


def _channel_attention_kernel(w_ref, x_ref, o_ref, *, cr, chunk):
    # w_ref: VMEM (C, 2*cr) f32 -- [fc1.T | fc2] packed side by side.
    # x_ref: VMEM (Bt, C, HW)   -- lane-dense spatial axis, native dtype.
    # o_ref: VMEM (Bt, C, HW)
    bt, c, hw = x_ref.shape
    n_chunks = hw // chunk

    w = w_ref[...]                                   # (C, 2*Cr) f32
    w1t = w[:, :cr]                                  # (C, Cr) = fc1 weight^T
    w2 = w[:, cr:]                                   # (C, Cr) = fc2 weight

    # --- Spatial pooling: sum + max over HW with f32 accumulation ----------
    # Chunked over the lane axis (static slices are zero-cost ref views) so a
    # bf16 tile is only upcast one chunk at a time; f32 astype is identity.
    sum_acc = jnp.zeros((bt, c, 1), jnp.float32)
    max_acc = jnp.full((bt, c, 1), -jnp.inf, jnp.float32)
    for k in range(n_chunks):
        xc = x_ref[:, :, k * chunk:(k + 1) * chunk].astype(jnp.float32)
        sum_acc = sum_acc + jnp.sum(xc, axis=2, keepdims=True)
        max_acc = jnp.maximum(max_acc, jnp.max(xc, axis=2, keepdims=True))
    avg = sum_acc * (1.0 / float(hw))                # (Bt, C, 1)

    # --- Tiny channel MLP: VPU broadcasts + XLU reduces, no MXU ------------
    # fc1 is bias-free, so fc1(avg) + fc1(max) == fc1(avg + max) exactly.
    s = avg + max_acc                                # (Bt, C, 1)
    h = jnp.sum(w1t[None, :, :] * s, axis=1, keepdims=True)       # (Bt, 1, Cr)
    h = jnp.maximum(h, 0.0)                          # ReLU
    logits = jnp.sum(w2[None, :, :] * h, axis=2, keepdims=True)   # (Bt, C, 1)
    gate = jax.nn.sigmoid(logits)                    # exp on EUP

    # --- Gate broadcast over the dense spatial axis; contiguous store ------
    # Multiply in the native dtype (exact for f32; bf16 stays in bf16 vregs on
    # v6e/v7x bf16 VPU; v5e upconverts internally anyway).
    o_ref[...] = x_ref[...] * gate.astype(o_ref.dtype)


def _pick_batch_tile(batch, per_b_bytes, target_bytes=2 << 20):
    """Largest Bt dividing `batch`, targeting ~target_bytes per block while
    keeping >= 2 grid steps when possible (v7x has 2 TensorCores)."""
    bt = int(max(1, min(batch, target_bytes // max(per_b_bytes, 1))))
    if batch >= 2:
        bt = min(bt, batch // 2)
    bt = max(bt, 1)
    while batch % bt:
        bt -= 1
    return bt


def _pick_hw_chunk(hw):
    """Lane-axis chunk for the pooling reduction (multiple of 128 if tiling)."""
    if hw <= 512:
        return hw
    for c in (512, 384, 256, 128):
        if hw % c == 0:
            return c
    return hw


@jax.jit
def channel_attention(x, fc1_w, fc2_w):
    """x: (B, C, H, W). fc1_w: (C//r, C, 1, 1). fc2_w: (C, C//r, 1, 1)."""
    B, C, H, W = x.shape
    HW = H * W
    Cr = fc1_w.shape[0]

    x_flat = x.reshape(B, C, HW)                          # lane-dense spatial
    # Pack fc1.T and fc2 into one (C, 2*Cr) buffer: single small weight DMA.
    w1t = fc1_w.reshape(Cr, C).T.astype(jnp.float32)      # (C, Cr)
    w2 = fc2_w.reshape(C, Cr).astype(jnp.float32)         # (C, Cr)
    w_packed = jnp.concatenate([w1t, w2], axis=1)         # (C, 2*Cr)

    per_b_bytes = C * HW * x.dtype.itemsize
    Bt = _pick_batch_tile(B, per_b_bytes)
    chunk = _pick_hw_chunk(HW)

    block_bytes = Bt * per_b_bytes
    w_bytes = w_packed.size * 4
    # Double-buffered x block + double-buffered out block + weights + slack,
    # capped at 48 MiB so it is safe on v7x (64 MiB physical VMEM).
    vmem_limit = int(min(max(4 * block_bytes + 2 * w_bytes + (2 << 20),
                             16 << 20), 48 << 20))

    kernel = functools.partial(_channel_attention_kernel, cr=Cr, chunk=chunk)

    out_flat = pl.pallas_call(
        kernel,
        out_shape=jax.ShapeDtypeStruct((B, C, HW), x.dtype),
        grid=(B // Bt,),
        in_specs=[
            pl.BlockSpec((C, 2 * Cr), lambda b: (0, 0)),       # packed weights
            pl.BlockSpec((Bt, C, HW), lambda b: (b, 0, 0)),    # x batch tile
        ],
        out_specs=pl.BlockSpec((Bt, C, HW), lambda b: (b, 0, 0)),
        input_output_aliases={1: 0},     # gated result overwrites x_flat buffer
        compiler_params=pltpu.CompilerParams(
            dimension_semantics=("parallel",),
            vmem_limit_bytes=vmem_limit),
    )(w_packed, x_flat)
    return out_flat.reshape(B, C, H, W)


def _reference(x, fc1_w, fc2_w):
    B, C, H, W = x.shape
    Cr = fc1_w.shape[0]
    W1 = fc1_w.reshape(Cr, C)
    W2 = fc2_w.reshape(C, Cr)
    avg = jnp.mean(x, axis=(2, 3), keepdims=True)          # (B, C, 1, 1)
    mx = jnp.max(x, axis=(2, 3), keepdims=True)

    def fc(Wm, v):
        return jnp.einsum("oc,bchw->bohw", Wm, v)

    attn = fc(W1, avg) + fc(W1, mx)
    attn = jax.nn.relu(attn)
    attn = fc(W2, attn)
    return x * jax.nn.sigmoid(attn)


if __name__ == "__main__":
    key = jax.random.PRNGKey(0)
    kx, k1, k2 = jax.random.split(key, 3)

    # Small shapes consistent with the module: reduction=16 => C >= 16.
    B, C, H, W = 2, 32, 16, 16
    reduction = 16
    Cr = C // reduction                                     # 2

    x = jax.random.normal(kx, (B, C, H, W), dtype=jnp.float32)
    fc1_w = 0.1 * jax.random.normal(k1, (Cr, C, 1, 1), dtype=jnp.float32)
    fc2_w = 0.1 * jax.random.normal(k2, (C, Cr, 1, 1), dtype=jnp.float32)

    out = channel_attention(x, fc1_w, fc2_w)
    out = jax.block_until_ready(out)

    ref = _reference(x, fc1_w, fc2_w)
    assert out.shape == (B, C, H, W)
    assert jnp.allclose(out, ref, rtol=1e-4, atol=1e-5), "mismatch vs reference"
    print("KERNEL_OK")
</pallas_src>

<mosaic_0001>
module attributes {stable_mosaic.version = 11 : i64} {
  func.func @_channel_attention_kernel(%arg0: i32, %arg1: memref<32x4xf32, #tpu.memory_space<vmem>>, %arg2: memref<1x32x256xf32, #tpu.memory_space<vmem>>, %arg3: memref<1x32x256xf32, #tpu.memory_space<vmem>>) attributes {dimension_semantics = [#tpu.dimension_semantics<parallel>], iteration_bounds = array<i64: 2>, scalar_prefetch = 0 : i64, scratch_operands = 0 : i64, tpu.core_type = #tpu.core_type<tc>, window_params = [{pipeline_mode = #tpu.pipeline_mode<synchronous>, transform_indices = @transform_0, window_bounds = array<i64: 32, 4>}, {transform_indices = @transform_1, window_bounds = array<i64: 1, 32, 256>}, {transform_indices = @transform_2, window_bounds = array<i64: 1, 32, 256>}]} {
    %c0 = arith.constant 0 : index
    %c0_0 = arith.constant 0 : index
    %0 = vector.load %arg1[%c0, %c0_0] : memref<32x4xf32, #tpu.memory_space<vmem>>, vector<32x4xf32>
    %1 = vector.extract_strided_slice %0 {offsets = [0, 0], sizes = [32, 2], strides = [1, 1]} : vector<32x4xf32> to vector<32x2xf32>
    %2 = vector.extract_strided_slice %0 {offsets = [0, 2], sizes = [32, 2], strides = [1, 1]} : vector<32x4xf32> to vector<32x2xf32>
    %cst = arith.constant 0.000000e+00 : f32
    %3 = vector.broadcast %cst : f32 to vector<1x32x1xf32>
    %cst_1 = arith.constant 0xFF800000 : f32
    %4 = vector.broadcast %cst_1 : f32 to vector<1x32x1xf32>
    %c0_2 = arith.constant 0 : index
    %c0_3 = arith.constant 0 : index
    %c0_4 = arith.constant 0 : index
    %5 = vector.load %arg2[%c0_2, %c0_3, %c0_4] : memref<1x32x256xf32, #tpu.memory_space<vmem>>, vector<1x32x256xf32>
    %cst_5 = arith.constant dense<0.000000e+00> : vector<1x32xf32>
    %6 = vector.multi_reduction <add>, %5, %cst_5 [2] : vector<1x32x256xf32> to vector<1x32xf32>
    %7 = vector.shape_cast %6 : vector<1x32xf32> to vector<1x32x1xf32>
    %8 = arith.addf %3, %7 : vector<1x32x1xf32>
    %cst_6 = arith.constant dense<0xFF800000> : vector<1x32xf32>
    %9 = vector.multi_reduction <maximumf>, %5, %cst_6 [2] : vector<1x32x256xf32> to vector<1x32xf32>
    %10 = vector.shape_cast %9 : vector<1x32xf32> to vector<1x32x1xf32>
    %11 = arith.maximumf %4, %10 : vector<1x32x1xf32>
    %cst_7 = arith.constant 3.906250e-03 : f32
    %12 = vector.broadcast %cst_7 : f32 to vector<1x32x1xf32>
    %13 = arith.mulf %8, %12 : vector<1x32x1xf32>
    %14 = arith.addf %13, %11 : vector<1x32x1xf32>
    %15 = vector.shape_cast %1 : vector<32x2xf32> to vector<1x32x2xf32>
    %16 = vector.broadcast %14 : vector<1x32x1xf32> to vector<1x32x2xf32>
    %17 = arith.mulf %15, %16 : vector<1x32x2xf32>
    %cst_8 = arith.constant dense<0.000000e+00> : vector<1x2xf32>
    %18 = vector.multi_reduction <add>, %17, %cst_8 [1] : vector<1x32x2xf32> to vector<1x2xf32>
    %19 = vector.shape_cast %18 : vector<1x2xf32> to vector<1x1x2xf32>
    %cst_9 = arith.constant 0.000000e+00 : f32
    %20 = vector.broadcast %cst_9 : f32 to vector<1x1x2xf32>
    %21 = arith.maximumf %19, %20 : vector<1x1x2xf32>
    %22 = vector.shape_cast %2 : vector<32x2xf32> to vector<1x32x2xf32>
    %23 = vector.broadcast %21 : vector<1x1x2xf32> to vector<1x32x2xf32>
    %24 = arith.mulf %22, %23 : vector<1x32x2xf32>
    %cst_10 = arith.constant dense<0.000000e+00> : vector<1x32xf32>
    %25 = vector.multi_reduction <add>, %24, %cst_10 [2] : vector<1x32x2xf32> to vector<1x32xf32>
    %26 = vector.shape_cast %25 : vector<1x32xf32> to vector<1x32x1xf32>
    %27 = arith.negf %26 : vector<1x32x1xf32>
    %28 = math.exp %27 : vector<1x32x1xf32>
    %cst_11 = arith.constant 1.000000e+00 : f32
    %29 = vector.broadcast %cst_11 : f32 to vector<1x32x1xf32>
    %30 = arith.addf %29, %28 : vector<1x32x1xf32>
    %31 = arith.divf %29, %30 : vector<1x32x1xf32>
    %c0_12 = arith.constant 0 : index
    %c0_13 = arith.constant 0 : index
    %c0_14 = arith.constant 0 : index
    %32 = vector.load %arg2[%c0_12, %c0_13, %c0_14] : memref<1x32x256xf32, #tpu.memory_space<vmem>>, vector<1x32x256xf32>
    %33 = vector.broadcast %31 : vector<1x32x1xf32> to vector<1x32x256xf32>
    %34 = arith.mulf %32, %33 : vector<1x32x256xf32>
    %c0_15 = arith.constant 0 : index
    %c0_16 = arith.constant 0 : index
    %c0_17 = arith.constant 0 : index
    %35 = vector.load %arg3[%c0_15, %c0_16, %c0_17] : memref<1x32x256xf32, #tpu.memory_space<vmem>>, vector<1x32x256xf32>
    tpu.vector_store %arg3[%c0_15, %c0_16, %c0_17], %34 {strides = array<i32>} : memref<1x32x256xf32, #tpu.memory_space<vmem>>, vector<1x32x256xf32>,
    return
  }
  func.func @transform_0(%arg0: i32) -> (i32, i32) {
    %c0_i32 = arith.constant 0 : i32
    %c0_i32_0 = arith.constant 0 : i32
    %c0_i32_1 = arith.constant 0 : i32
    return %c0_i32, %c0_i32_0 : i32, i32
  }
  func.func @transform_1(%arg0: i32) -> (i32, i32, i32) {
    %c0_i32 = arith.constant 0 : i32
    %c0_i32_0 = arith.constant 0 : i32
    %c0_i32_1 = arith.constant 0 : i32
    return %arg0, %c0_i32, %c0_i32_0 : i32, i32, i32
  }
  func.func @transform_2(%arg0: i32) -> (i32, i32, i32) {
    %c0_i32 = arith.constant 0 : i32
    %c0_i32_0 = arith.constant 0 : i32
    %c0_i32_1 = arith.constant 0 : i32
    return %arg0, %c0_i32, %c0_i32_0 : i32, i32, i32
  }
}

</mosaic_0001>

<llo_original>
// kernel: channel_attention.1
$region0: #{channel_attention.1}
  #allocation0 [shape = 'u32[]', space=smem, size = 0x4, offset = 0x4, fixed_abs, tag = 'smem constant byte address 0x4 - core index']
  #allocation1 [shape = 'u32[144,128]{1,0:T(1,128)}', space=vmem, size = 0x12000, scoped, tag = 'internal scratch']
  %s0 = inlined_call_operand.vmem [shape: f32[32,4], index: 0, kind: input, shape index: {}]
  %s1 = inlined_call_operand.vmem [shape: f32[2,32,256], index: 1, kind: input, shape index: {}, may-alias: {1,2}]
  %s2 = inlined_call_operand.vmem [shape: f32[2,32,256], index: 2, kind: output, shape index: {}, may-alias: {1,2}]
  %s3 = sld [smem:[#allocation0]]
  $region41: #{channel_attention.1} parent=0
    _
  %s5 = ssub.s32 1, %s3
  %s6 = scalar_select 0, %s5, %s3
  loop: start=0, step=1, limit=4
  $region2: #{channel_attention.1} parent=0 // loop_pre_header
    _
  $region3: #{channel_attention.1} parent=0 // loop_header
    %s8 = sphi 0, %s12
    %p9 = scmp.ge.s32.totalorder %s8, 4
    %s16 = sphi 0, %s16
    %s18 = sphi 0, %s16
    %s19 = sphi 0, %s18
    %s33 = sphi 0, %s19
    %s39 = sphi 0, %s41
    %s42 = sphi 0, %s39
    %s43 = sphi 0, %s42
    %s59 = sphi 0, %s43
    %s65 = sphi 0, %s67
    %s68 = sphi 0, %s65
    %s69 = sphi 0, %s68
    %s85 = sphi 0, %s69
  $region4: #{channel_attention.1} parent=0 // loop_header_branch
    %11 = sbr.rel (%p9) target = $region8
  $region5: #{channel_attention.1} parent=0 // loop_body
    %s13 = ssub.s32 %s8, 1
    %s14 = ssub.s32 %s8, 2
    %s15 = sadd.s32 %s8, 1
    %s17 = sadd.s32 %s16, 1
    %p20 = scmp.eq.s32.totalorder %s8, 1
    %p21 = scmp.ne.s32.totalorder %s16, %s18
    %p22 = scmp.eq.s32.totalorder %s8, 0
    %p23 = por %p21, %p22
    %p24 = scmp.ne.s32.totalorder %s16, %s18
    %p25 = scmp.eq.s32.totalorder %s13, 1
    %p26 = por %p24, %p25
    %p27 = scmp.ne.s32.totalorder %s18, %s19
    %p28 = scmp.eq.s32.totalorder %s13, 0
    %p29 = por %p27, %p28
    %p30 = scmp.ne.s32.totalorder %s18, %s19
    %p31 = scmp.eq.s32.totalorder %s14, 1
    %p32 = por %p30, %p31
    %p34 = scmp.ne.s32.totalorder %s19, %s33
    %p35 = scmp.eq.s32.totalorder %s14, 0
    %p36 = por %p34, %p35
    %s37 = ssub.s32 %s8, %s15
    %p38 = scmp.eq.s32.totalorder %s37, 0
    %s40 = sadd.s32 %s39, 1
    %s41 = scalar_select %p38, %s39, %s40
    %p44 = pneg %p38
    %p45 = scmp.eq.s32.totalorder %s8, 1
    %p46 = por %p44, %p45
    %p47 = scmp.ne.s32.totalorder %s39, %s42
    %p48 = scmp.eq.s32.totalorder %s8, 0
    %p49 = por %p47, %p48
    %p50 = scmp.ne.s32.totalorder %s39, %s42
    %p51 = scmp.eq.s32.totalorder %s13, 1
    %p52 = por %p50, %p51
    %p53 = scmp.ne.s32.totalorder %s42, %s43
    %p54 = scmp.eq.s32.totalorder %s13, 0
    %p55 = por %p53, %p54
    %p56 = scmp.ne.s32.totalorder %s42, %s43
    %p57 = scmp.eq.s32.totalorder %s14, 1
    %p58 = por %p56, %p57
    %p60 = scmp.ne.s32.totalorder %s43, %s59
    %p61 = scmp.eq.s32.totalorder %s14, 0
    %p62 = por %p60, %p61
    %s63 = ssub.s32 %s8, %s15
    %p64 = scmp.eq.s32.totalorder %s63, 0
    %s66 = sadd.s32 %s65, 1
    %s67 = scalar_select %p64, %s65, %s66
    %p70 = pneg %p64
    %p71 = scmp.eq.s32.totalorder %s8, 1
    %p72 = por %p70, %p71
    %p73 = scmp.ne.s32.totalorder %s65, %s68
    %p74 = scmp.eq.s32.totalorder %s8, 0
    %p75 = por %p73, %p74
    %p76 = scmp.ne.s32.totalorder %s65, %s68
    %p77 = scmp.eq.s32.totalorder %s13, 1
    %p78 = por %p76, %p77
    %p79 = scmp.ne.s32.totalorder %s68, %s69
    %p80 = scmp.eq.s32.totalorder %s13, 0
    %p81 = por %p79, %p80
    %p82 = scmp.ne.s32.totalorder %s68, %s69
    %p83 = scmp.eq.s32.totalorder %s14, 1
    %p84 = por %p82, %p83
    %p86 = scmp.ne.s32.totalorder %s69, %s85
    %p87 = scmp.eq.s32.totalorder %s14, 0
    %p88 = por %p86, %p87
    %p89 = scmp.le.s32.totalorder 1, %s8
    %p90 = scmp.lt.s32.totalorder %s8, 3
    %p91 = pnand %p89, %p90
    %p92 = pneg %p91
    // Predicated region
    $region9: #{channel_attention.1} parent=5 // pred_check
      _
    $region10: #{channel_attention.1} parent=5 // pred_check_branch
      %94 = sbr.rel (%p91) target = $region12
    $region11: #{channel_attention.1} parent=5 // pred_region
      %s95 = ssub.s32 %s8, 1
      // Predicated region
      $region13: #{channel_attention.1} parent=11 // pred_check
        %p96 = pneg %p29
      $region14: #{channel_attention.1} parent=11 // pred_check_branch
        %98 = sbr.rel (%p96) target = $region16
      $region15: #{channel_attention.1} parent=11 // pred_region
        _
      $region16: #{channel_attention.1} parent=11 // pred_fallthru
        _
    $region12: #{channel_attention.1} parent=5 // pred_fallthru
      _
    %p99 = scmp.lt.s32.totalorder %s8, 2
    // Predicated region
    $region17: #{channel_attention.1} parent=5 // pred_check
      %p100 = pneg %p99
    $region18: #{channel_attention.1} parent=5 // pred_check_branch
      %102 = sbr.rel (%p100) target = $region20
    $region19: #{channel_attention.1} parent=5 // pred_region
      // Predicated region
      $region21: #{channel_attention.1} parent=19 // pred_check
        %p103 = pneg %p49
      $region22: #{channel_attention.1} parent=19 // pred_check_branch
        %105 = sbr.rel (%p103) target = $region24
      $region23: #{channel_attention.1} parent=19 // pred_region
        %p106 = scmp.lt.s32.totalorder %s8, 1
        %s107 = scalar_select %p106, %s8, 1
        %s108 = smul.addr %s107, 8
        %s109 = smul.addr %s108, 8
        %s110 = scalar_lea.vmem %s1, %s109
      $region24: #{channel_attention.1} parent=19 // pred_fallthru
        _
    $region20: #{channel_attention.1} parent=5 // pred_fallthru
      _
    %p111 = scmp.le.s32.totalorder 1, %s8
    %p112 = scmp.lt.s32.totalorder %s8, 3
    %p113 = pnand %p111, %p112
    %p114 = pneg %p113
    // Predicated region
    $region25: #{channel_attention.1} parent=5 // pred_check
      _
    $region26: #{channel_attention.1} parent=5 // pred_check_branch
      %116 = sbr.rel (%p113) target = $region28
    $region27: #{channel_attention.1} parent=5 // pred_region
      %s117 = ssub.s32 %s8, 1
      %p118 = pneg %p29
      %p119 = pneg %p26
      %p120 = scmp.lt.s32.totalorder %s13, 1
      %s121 = scalar_select %p120, %s13, 1
      %s122 = smul.addr %s121, 8
      %s123 = smul.addr %s122, 8
      %s124 = scalar_lea.vmem %s1, %s123
      %p125 = pneg %p55
      %p126 = pneg %p52
      %p127 = pneg %p81
      %p128 = pneg %p78
      %p129 = scmp.lt.s32.totalorder %s13, 1
      %s130 = scalar_select %p129, %s13, 1
      %s131 = smul.addr %s130, 8
      %s132 = smul.addr %s131, 8
      %s133 = scalar_lea.vmem %s2, %s132
      %p134 = scmp.lt.s32.totalorder %s13, 1
      %s135 = scalar_select %p134, %s13, 1
      %s136 = smul.addr %s135, 8
      %s137 = smul.addr %s136, 8
      %s138 = scalar_lea.vmem %s1, %s137
      %p139 = scmp.lt.s32.totalorder %s13, 1
      %s140 = scalar_select %p139, %s13, 1
      %s141 = smul.addr %s140, 8
      %s142 = smul.addr %s141, 8
      %s143 = scalar_lea.vmem %s2, %s142
      %v144 = vld [vmem:[%s0] sm:$0xff]
      %v145 = vld [vmem:[%s0 + $0x8] sm:$0xff]
      %v146 = vld [vmem:[%s0 + $0x10] sm:$0xff]
      %v147 = vld [vmem:[%s0 + $0x18] sm:$0xff]
      %v148 = vld [vmem:[%s138] sm:$0xff]
      %v149 = vld [vmem:[%s138 + $0x8] sm:$0xff]
      %v150 = vld [vmem:[%s138 + $0x10] sm:$0xff]
      %v151 = vld [vmem:[%s138 + $0x18] sm:$0xff]
      %v152 = vld [vmem:[%s138 + $0x20] sm:$0xff]
      %v153 = vld [vmem:[%s138 + $0x28] sm:$0xff]
      %v154 = vld [vmem:[%s138 + $0x30] sm:$0xff]
      %v155 = vld [vmem:[%s138 + $0x38] sm:$0xff]
      %v156 = vadd.f32 %v148, %v149
      %157 = vadd.xlane.f32.xlu0 %v156
      %v158 = vpop.xlane.xlu0 %157
      %v159 = vadd.f32 %v150, %v151
      %160 = vadd.xlane.f32.xlu0 %v159
      %v161 = vpop.xlane.xlu0 %160
      %v162 = vadd.f32 %v152, %v153
      %163 = vadd.xlane.f32.xlu0 %v162
      %v164 = vpop.xlane.xlu0 %163
      %v165 = vadd.f32 %v154, %v155
      %166 = vadd.xlane.f32.xlu0 %v165
      %v167 = vpop.xlane.xlu0 %166
      %v168 = vadd.f32 %v158, 0.0
      %v169 = vadd.f32 %v161, 0.0
      %v170 = vadd.f32 %v164, 0.0
      %v171 = vadd.f32 %v167, 0.0
      %v172 = vmax.f32 %v148, %v149
      %173 = vmax.xlane.f32.xlu0 %v172
      %v174 = vpop.xlane.xlu0 %173
      %v175 = vmax.f32 %v150, %v151
      %176 = vmax.xlane.f32.xlu0 %v175
      %v177 = vpop.xlane.xlu0 %176
      %v178 = vmax.f32 %v152, %v153
      %179 = vmax.xlane.f32.xlu0 %v178
      %v180 = vpop.xlane.xlu0 %179
      %v181 = vmax.f32 %v154, %v155
      %182 = vmax.xlane.f32.xlu0 %v181
      %v183 = vpop.xlane.xlu0 %182
      %v184 = vmul.f32 %v168, 0.00390625
      %v185 = vmul.f32 %v169, 0.00390625
      %v186 = vmul.f32 %v170, 0.00390625
      %v187 = vmul.f32 %v171, 0.00390625
      %v188 = vadd.f32 %v184, %v174
      %v189 = vadd.f32 %v185, %v177
      %v190 = vadd.f32 %v186, %v180
      %v191 = vadd.f32 %v187, %v183
      %v192 = vmul.f32 %v144, %v188
      %v193 = vmul.f32 %v145, %v189
      %v194 = vmul.f32 %v146, %v190
      %v195 = vmul.f32 %v147, %v191
      %vm196 = vcmask 15360
      %v197 = vsel %vm196, %v192, 0.0
      %v198 = vsel %vm196, %v193, 0.0
      %v199 = vadd.f32 %v197, %v198
      %v200 = vsel %vm196, %v194, 0.0
      %v201 = vadd.f32 %v199, %v200
      %v202 = vsel %vm196, %v195, 0.0
      %v203 = vadd.f32 %v201, %v202
      %v204 = vrot.slane %v203, 4
      %v205 = vadd.f32 %v203, %v204
      %v206 = vrot.slane %v205, 2
      %v207 = vadd.f32 %v205, %v206
      %v208 = vrot.slane %v207, 1
      %v209 = vadd.f32 %v207, %v208
      %v210 = vmax.f32 %v209, 0.0
      %212 = vrot.lane.b32.xlu0 %v210, 2
      %v213 = vpop.permute.xlu0 %212
      %v215 = vmul.f32 %v144, %v213
      %v216 = vmul.f32 %v145, %v213
      %v217 = vmul.f32 %v146, %v213
      %v218 = vmul.f32 %v147, %v213
      %223 = vrot.lane.b32.xlu0 %v215, 126
      %v224 = vpop.permute.xlu0 %223
      %225 = vrot.lane.b32.xlu0 %v216, 126
      %v226 = vpop.permute.xlu0 %225
      %227 = vrot.lane.b32.xlu0 %v217, 126
      %v228 = vpop.permute.xlu0 %227
      %229 = vrot.lane.b32.xlu0 %v218, 126
      %v230 = vpop.permute.xlu0 %229
      %v235 = vsel %vm196, %v224, 0.0
      %236 = vadd.xlane.f32.xlu0 %v235
      %v237 = vpop.xlane.xlu0 %236
      %v238 = vsel %vm196, %v226, 0.0
      %239 = vadd.xlane.f32.xlu0 %v238
      %v240 = vpop.xlane.xlu0 %239
      %v241 = vsel %vm196, %v228, 0.0
      %242 = vadd.xlane.f32.xlu0 %v241
      %v243 = vpop.xlane.xlu0 %242
      %v244 = vsel %vm196, %v230, 0.0
      %245 = vadd.xlane.f32.xlu0 %v244
      %v246 = vpop.xlane.xlu0 %245
      %v247 = vxor.u32 %v237, 2147483648
      %v248 = vxor.u32 %v240, 2147483648
      %v249 = vxor.u32 %v243, 2147483648
      %v250 = vxor.u32 %v246, 2147483648
      %v251 = vmul.f32 %v247, 1.442695
      %v252 = vpow.pop %v251
      %v253 = vmul.f32 %v248, 1.442695
      %v254 = vpow.pop %v253
      %v255 = vmul.f32 %v249, 1.442695
      %v256 = vpow.pop %v255
      %v257 = vmul.f32 %v250, 1.442695
      %v258 = vpow.pop %v257
      %v259 = vadd.f32 %v252, 1.0
      %v260 = vadd.f32 %v254, 1.0
      %v261 = vadd.f32 %v256, 1.0
      %v262 = vadd.f32 %v258, 1.0
      %v263 = vrcp.pop %v259
      %v264 = vmul.f32 1.0, %v263
      %v265 = vrcp.pop %v260
      %v266 = vmul.f32 1.0, %v265
      %v267 = vrcp.pop %v261
      %v268 = vmul.f32 1.0, %v267
      %v269 = vrcp.pop %v262
      %v270 = vmul.f32 1.0, %v269
      %v271 = vmul.f32 %v148, %v264
      %v272 = vmul.f32 %v149, %v264
      %v273 = vmul.f32 %v150, %v266
      %v274 = vmul.f32 %v151, %v266
      %v275 = vmul.f32 %v152, %v268
      %v276 = vmul.f32 %v153, %v268
      %v277 = vmul.f32 %v154, %v270
      %v278 = vmul.f32 %v155, %v270
      %279 = vst [vmem:[%s143] sm:$0xff] %v271
      %280 = vst [vmem:[%s143 + $0x8] sm:$0xff] %v272
      %281 = vst [vmem:[%s143 + $0x10] sm:$0xff] %v273
      %282 = vst [vmem:[%s143 + $0x18] sm:$0xff] %v274
      %283 = vst [vmem:[%s143 + $0x20] sm:$0xff] %v275
      %284 = vst [vmem:[%s143 + $0x28] sm:$0xff] %v276
      %285 = vst [vmem:[%s143 + $0x30] sm:$0xff] %v277
      %286 = vst [vmem:[%s143 + $0x38] sm:$0xff] %v278
      %p287 = scmp.lt.s32.totalorder %s13, 1
      %s288 = scalar_select %p287, %s13, 1
      %s289 = smul.addr %s288, 8
      %s290 = smul.addr %s289, 8
      %s291 = scalar_lea.vmem %s2, %s290
      // Predicated region
      $region29: #{channel_attention.1} parent=27 // pred_check
        %p292 = pneg %p78
      $region30: #{channel_attention.1} parent=27 // pred_check_branch
        %294 = sbr.rel (%p292) target = $region32
      $region31: #{channel_attention.1} parent=27 // pred_region
        _
      $region32: #{channel_attention.1} parent=27 // pred_fallthru
        _
    $region28: #{channel_attention.1} parent=5 // pred_fallthru
      _
    %p295 = scmp.le.s32.totalorder 2, %s8
    // Predicated region
    $region33: #{channel_attention.1} parent=5 // pred_check
      %p296 = pneg %p295
    $region34: #{channel_attention.1} parent=5 // pred_check_branch
      %298 = sbr.rel (%p296) target = $region36
    $region35: #{channel_attention.1} parent=5 // pred_region
      %s299 = ssub.s32 %s8, 2
      // Predicated region
      $region37: #{channel_attention.1} parent=35 // pred_check
        %p300 = pneg %p84
      $region38: #{channel_attention.1} parent=35 // pred_check_branch
        %302 = sbr.rel (%p300) target = $region40
      $region39: #{channel_attention.1} parent=35 // pred_region
        %p303 = scmp.lt.s32.totalorder %s14, 1
        %s304 = scalar_select %p303, %s14, 1
        %s305 = smul.addr %s304, 8
        %s306 = smul.addr %s305, 8
        %s307 = scalar_lea.vmem %s2, %s306
      $region40: #{channel_attention.1} parent=35 // pred_fallthru
        _
    $region36: #{channel_attention.1} parent=5 // pred_fallthru
      _
  $region6: #{channel_attention.1} parent=0 // loop_footer
    %s12 = sadd.s32 1, %s8
  $region7: #{channel_attention.1} parent=0 // loop_footer_branch
    %7 = sbr.rel target = $region3
  $region8: #{channel_attention.1} parent=0 // loop_exit
    _

</llo_original>
